<compile_context>
chip_gen: v5e
topology: v5e:2x2
jax: 0.10.0
libtpu: 0.0.40
codegen_flags: <defaults>
</compile_context>

<pallas_src>
import functools

import jax
import jax.numpy as jnp
from jax.experimental import pallas as pl
from jax.experimental.pallas import tpu as pltpu

_LANE = 128


def _round_up(v, m):
    return ((v + m - 1) // m) * m


def _concat_pad_kernel(x_ref, o_ref, *, segments, w_out):
    """Assemble [zeros | src slice | zeros | ...] in registers; store once.

    segments: static tuple of (src_start, length, dst_start), sorted by
    dst_start and non-overlapping in the output row.
    """
    x = x_ref[...]
    rows = x.shape[0]
    dt = o_ref.dtype
    pieces = []
    pos = 0
    for src, length, dst in segments:
        if dst > pos:
            pieces.append(jnp.zeros((rows, dst - pos), dt))
        pieces.append(x[:, src:src + length])
        pos = dst + length
    if pos < w_out:
        pieces.append(jnp.zeros((rows, w_out - pos), dt))
    # Single lane-dense store of the whole block (no masked strip stores).
    o_ref[...] = jnp.concatenate(pieces, axis=-1)


def _strip_store_kernel(x_ref, o_ref, *, segments, w_out):
    """Safety-net kernel (previously validated lowering path): strip stores."""
    rows = x_ref.shape[0]
    dt = o_ref.dtype
    pos = 0
    for src, length, dst in segments:
        if dst > pos:
            o_ref[:, pos:dst] = jnp.zeros((rows, dst - pos), dt)
        o_ref[:, dst:dst + length] = x_ref[:, src:src + length]
        pos = dst + length
    if pos < w_out:
        o_ref[:, pos:w_out] = jnp.zeros((rows, w_out - pos), dt)


def one_side_padding(x, kernel_size, direction):
    """Pallas equivalent of OneSidePadding.forward for NCHW inputs."""
    pad = kernel_size // 2
    if direction not in ("vertical", "horizontal"):
        raise ValueError(f"unknown direction {direction!r}")
    if pad == 0:
        return x  # identity, nothing to pad

    N, C, H, W = x.shape
    itemsize = jnp.dtype(x.dtype).itemsize
    sub = max(8, 32 // itemsize)  # packed sublane multiple: f32 8, bf16 16, i8 32

    if direction == "vertical":
        # Each (n, c) image is contiguous, so padding H by p == padding the
        # flattened H*W row by p*W zeros on each side.  Lane-dense in and out.
        x2 = x.reshape(N * C, H * W)
        w_in, w_out = H * W, (H + 2 * pad) * W
        segments = ((0, H * W, pad * W),)
        out_4d = (N, C, H + 2 * pad, W)
    else:  # horizontal
        w_row = W + 2 * pad
        if w_row < _LANE and H <= 128:
            # Small W: build the whole padded image row (H segments with zero
            # gaps) in registers so the output block stays lane-dense.
            x2 = x.reshape(N * C, H * W)
            w_in, w_out = H * W, H * w_row
            segments = tuple((h * W, W, h * w_row + pad) for h in range(H))
        else:
            # Wide rows are already lane-dense; pad W directly.
            x2 = x.reshape(N * C * H, W)
            w_in, w_out = W, w_row
            segments = ((0, W, pad),)
        out_4d = (N, C, H, W + 2 * pad)

    R = x2.shape[0]

    # --- Block sizing from PHYSICAL (lane/sublane padded) tile sizes. -------
    bytes_per_row = (_round_up(w_in, _LANE) + _round_up(w_out, _LANE)) * itemsize
    stage_budget = 4 << 20  # in + out blocks of ONE pipeline stage (~2 MiB out)
    rows_by_vmem = max(sub, (stage_budget // bytes_per_row) // sub * sub)
    # Prefer >= ~8 grid steps on large problems: keeps the double-buffered
    # pipeline busy and lets v7x shard the "parallel" axis over its 2 TCs.
    rows_by_split = max(sub, _round_up(pl.cdiv(R, 8), sub))
    block_rows = min(rows_by_vmem, rows_by_split)
    if block_rows >= R:
        block_rows = R  # full extent: always a legal block shape
    grid = (pl.cdiv(R, block_rows),)

    stage_bytes = _round_up(max(block_rows, sub), sub) * bytes_per_row
    vmem_limit = int(min(64 << 20, max(24 << 20, 2 * stage_bytes + (1 << 20))))

    def run(kernel_fn):
        return pl.pallas_call(
            functools.partial(kernel_fn, segments=segments, w_out=w_out),
            out_shape=jax.ShapeDtypeStruct((R, w_out), x.dtype),
            grid=grid,
            in_specs=[pl.BlockSpec((block_rows, w_in), lambda i: (i, 0))],
            out_specs=pl.BlockSpec((block_rows, w_out), lambda i: (i, 0)),
            compiler_params=pltpu.CompilerParams(
                dimension_semantics=("parallel",),
                vmem_limit_bytes=vmem_limit,
            ),
        )(x2)

    try:
        out2 = run(_concat_pad_kernel)  # single full-tile store (preferred)
    except Exception:
        # Safety net in case this Mosaic build rejects unaligned lane
        # concatenation: identical semantics via per-strip stores.
        out2 = run(_strip_store_kernel)

    return out2.reshape(out_4d)


def _reference(x, kernel_size, direction):
    pad = kernel_size // 2
    if direction == "vertical":
        pad_width = ((0, 0), (0, 0), (pad, pad), (0, 0))
    else:
        pad_width = ((0, 0), (0, 0), (0, 0), (pad, pad))
    return jnp.pad(x, pad_width, mode="constant")


if __name__ == "__main__":
    key = jax.random.PRNGKey(0)
    # Module has no weights; only input needed. NCHW.
    x = jax.random.normal(key, (2, 4, 16, 16), dtype=jnp.float32)

    kernel_size = 3  # pad_len = 1

    ok = True
    for direction in ("vertical", "horizontal"):
        out = jax.block_until_ready(one_side_padding(x, kernel_size, direction))
        ref = _reference(x, kernel_size, direction)
        if out.shape != ref.shape or not bool(jnp.allclose(out, ref)):
            ok = False

    if ok:
        print("KERNEL_OK")
</pallas_src>

<mosaic_0001>
module attributes {stable_mosaic.version = 11 : i64} {
  func.func @_concat_pad_kernel(%arg0: i32, %arg1: memref<8x256xf32, #tpu.memory_space<vmem>>, %arg2: memref<8x288xf32, #tpu.memory_space<vmem>>) attributes {dimension_semantics = [#tpu.dimension_semantics<parallel>], iteration_bounds = array<i64: 1>, scalar_prefetch = 0 : i64, scratch_operands = 0 : i64, tpu.core_type = #tpu.core_type<tc>, window_params = [{transform_indices = @transform_0, window_bounds = array<i64: 8, 256>}, {transform_indices = @transform_1, window_bounds = array<i64: 8, 288>}]} {
    %c0 = arith.constant 0 : index
    %c0_0 = arith.constant 0 : index
    %0 = vector.load %arg1[%c0, %c0_0] : memref<8x256xf32, #tpu.memory_space<vmem>>, vector<8x256xf32>
    %cst = arith.constant 0.000000e+00 : f32
    %1 = vector.broadcast %cst : f32 to vector<8x16xf32>
    %cst_1 = arith.constant 0.000000e+00 : f32
    %2 = vector.broadcast %cst_1 : f32 to vector<8x16xf32>
    %3 = tpu.concatenate %1, %0, %2 in 1 : vector<8x16xf32>, vector<8x256xf32>, vector<8x16xf32> -> vector<8x288xf32>
    %c0_2 = arith.constant 0 : index
    %c0_3 = arith.constant 0 : index
    %4 = vector.load %arg2[%c0_2, %c0_3] : memref<8x288xf32, #tpu.memory_space<vmem>>, vector<8x288xf32>
    tpu.vector_store %arg2[%c0_2, %c0_3], %3 {strides = array<i32>} : memref<8x288xf32, #tpu.memory_space<vmem>>, vector<8x288xf32>,
    return
  }
  func.func @transform_0(%arg0: i32) -> (i32, i32) {
    %c0_i32 = arith.constant 0 : i32
    %c0_i32_0 = arith.constant 0 : i32
    return %arg0, %c0_i32 : i32, i32
  }
  func.func @transform_1(%arg0: i32) -> (i32, i32) {
    %c0_i32 = arith.constant 0 : i32
    %c0_i32_0 = arith.constant 0 : i32
    return %arg0, %c0_i32 : i32, i32
  }
}

module attributes {stable_mosaic.version = 11 : i64} {
  func.func @_strip_store_kernel(%arg0: i32, %arg1: memref<8x256xf32, #tpu.memory_space<vmem>>, %arg2: memref<8x288xf32, #tpu.memory_space<vmem>>) attributes {dimension_semantics = [#tpu.dimension_semantics<parallel>], iteration_bounds = array<i64: 1>, scalar_prefetch = 0 : i64, scratch_operands = 0 : i64, tpu.core_type = #tpu.core_type<tc>, window_params = [{transform_indices = @transform_0, window_bounds = array<i64: 8, 256>}, {transform_indices = @transform_1, window_bounds = array<i64: 8, 288>}]} {
    %cst = arith.constant 0.000000e+00 : f32
    %0 = vector.broadcast %cst : f32 to vector<8x16xf32>
    %c0 = arith.constant 0 : index
    %c0_0 = arith.constant 0 : index
    %1 = vector.load %arg2[%c0, %c0_0] : memref<8x288xf32, #tpu.memory_space<vmem>>, vector<8x16xf32>
    tpu.vector_store %arg2[%c0, %c0_0], %0 {strides = array<i32>} : memref<8x288xf32, #tpu.memory_space<vmem>>, vector<8x16xf32>,
    %c0_1 = arith.constant 0 : index
    %c0_2 = arith.constant 0 : index
    %2 = vector.load %arg1[%c0_1, %c0_2] : memref<8x256xf32, #tpu.memory_space<vmem>>, vector<8x256xf32>
    %c0_3 = arith.constant 0 : index
    %c16 = arith.constant 16 : index
    %3 = vector.load %arg2[%c0_3, %c16] : memref<8x288xf32, #tpu.memory_space<vmem>>, vector<8x256xf32>
    tpu.vector_store %arg2[%c0_3, %c16], %2 {strides = array<i32>} : memref<8x288xf32, #tpu.memory_space<vmem>>, vector<8x256xf32>,
    %cst_4 = arith.constant 0.000000e+00 : f32
    %4 = vector.broadcast %cst_4 : f32 to vector<8x16xf32>
    %c0_5 = arith.constant 0 : index
    %c272 = arith.constant 272 : index
    %5 = vector.load %arg2[%c0_5, %c272] : memref<8x288xf32, #tpu.memory_space<vmem>>, vector<8x16xf32>
    tpu.vector_store %arg2[%c0_5, %c272], %4 {strides = array<i32>} : memref<8x288xf32, #tpu.memory_space<vmem>>, vector<8x16xf32>,
    return
  }
  func.func @transform_0(%arg0: i32) -> (i32, i32) {
    %c0_i32 = arith.constant 0 : i32
    %c0_i32_0 = arith.constant 0 : i32
    return %arg0, %c0_i32 : i32, i32
  }
  func.func @transform_1(%arg0: i32) -> (i32, i32) {
    %c0_i32 = arith.constant 0 : i32
    %c0_i32_0 = arith.constant 0 : i32
    return %arg0, %c0_i32 : i32, i32
  }
}

</mosaic_0001>

<llo_original>
// kernel: tpu_custom_call.1
$region0: #{tpu_custom_call.1}
  #allocation0 [shape = 'u32[]', space=smem, size = 0x4, offset = 0x4, fixed_abs, tag = 'smem constant byte address 0x4 - core index']
  #allocation1 [shape = 'u32[72,128]{1,0:T(1,128)}', space=vmem, size = 0x9000, scoped, tag = 'internal scratch']
  %s0 = inlined_call_operand.hbm [shape: f32[8,256], index: 0, kind: input, shape index: {}]
  %s1 = inlined_call_operand.hbm [shape: f32[8,288], index: 1, kind: output, shape index: {}]
  %s2 = sld [smem:[#allocation0]]
  $region18: #{tpu_custom_call.1} parent=0
    _
  %s4 = ssub.s32 1, %s2
  %s5 = scalar_select 0, %s4, %s2
  $region1: #{tpu_custom_call.1} parent=0
    #allocation2 [shape = 'u8[8192]{0}', space=vmem, size = 0x2000, scoped, tag = 'input window, operand 0, single buffered']
    #allocation3 [shape = 's32[1]{0}', space=sflag, size = 0x4, scoped, tag = 'scoped memory for tpu_custom_call.1']
    #allocation4 [shape = 's32[1]{0}', space=sflag, size = 0x4, scoped, tag = 'scoped memory for tpu_custom_call.1']
    #allocation5 [shape = 'u8[12288]{0}', space=vmem, size = 0x3000, scoped, tag = 'output window, operand 0, single buffered']
    %6 = vsyncpa [#allocation3], 0
    %7 = vsyncpa [#allocation4], 0
    // Predicated region
    $region2: #{tpu_custom_call.1} parent=1 // pred_check
      _
    $region3: #{tpu_custom_call.1} parent=1 // pred_check_branch
      %9 = sbr.rel (0) target = $region5
    $region4: #{tpu_custom_call.1} parent=1 // pred_region
      %11 = vsyncadd [#allocation3], 0
      %s13 = sshll.u32 %s0, 4
      %s14 = int_to_ptr.hbm [resolvable:$true] %s13
      %s15 = sshll.u32 [#allocation2], 4
      %s16 = int_to_ptr.vmem [resolvable:$true] %s15
      %18 = dma.hbm_to_vmem [thread:$0]  %s14, 256, %s16, [#allocation3]
    $region5: #{tpu_custom_call.1} parent=1 // pred_fallthru
      _
    // Predicated region
    $region6: #{tpu_custom_call.1} parent=1 // pred_check
      _
    $region7: #{tpu_custom_call.1} parent=1 // pred_check_branch
      %20 = sbr.rel (0) target = $region9
    $region8: #{tpu_custom_call.1} parent=1 // pred_region
      %22 = dma.done [#allocation3], 256
    $region9: #{tpu_custom_call.1} parent=1 // pred_fallthru
      _
    %v23 = vld [vmem:[#allocation2] sm:$0xff]
    %v24 = vld [vmem:[#allocation2 + $0x8] sm:$0xff]
    %27 = vrot.lane.b32.xlu0 %v23, 16
    %v28 = vpop.permute.xlu0 %27
    %29 = vrot.lane.b32.xlu0 %v24, 16
    %v30 = vpop.permute.xlu0 %29
    %vm31 = vcmask 130048
    %v32 = vsel %vm31, %v28, %v30
    %v36 = vsel %vm31, 0.0, %v28
    %v37 = vsel %vm31, %v30, 0.0
    %38 = vst [vmem:[#allocation5] sm:$0xff] %v36
    %39 = vst [vmem:[#allocation5 + $0x8] sm:$0xff] %v32
    %vm40 = vcmask 261120
    %41 = vst.msk [vmem:[#allocation5 + $0x10] sm:$0xff] %vm40, %v37
    // Predicated region
    $region10: #{tpu_custom_call.1} parent=1 // pred_check
      _
    $region11: #{tpu_custom_call.1} parent=1 // pred_check_branch
      %43 = sbr.rel (0) target = $region13
    $region12: #{tpu_custom_call.1} parent=1 // pred_region
      %45 = vsyncadd [#allocation4], 0
      %s47 = sshll.u32 [#allocation5], 4
      %s48 = int_to_ptr.vmem [resolvable:$true] %s47
      %s49 = sshll.u32 %s1, 4
      %s50 = int_to_ptr.hbm [resolvable:$true] %s49
      %52 = dma.vmem_to_hbm [thread:$0]  %s48, 384, %s50, [#allocation4]
    $region13: #{tpu_custom_call.1} parent=1 // pred_fallthru
      _
    // Predicated region
    $region14: #{tpu_custom_call.1} parent=1 // pred_check
      _
    $region15: #{tpu_custom_call.1} parent=1 // pred_check_branch
      %54 = sbr.rel (0) target = $region17
    $region16: #{tpu_custom_call.1} parent=1 // pred_region
      %56 = dma.done [#allocation4], 384
    $region17: #{tpu_custom_call.1} parent=1 // pred_fallthru
      _
    %57 = vsyncpa [#allocation3], 1
    %58 = vsyncpa [#allocation4], 1

// kernel: tpu_custom_call.1
$region0: #{tpu_custom_call.1}
  #allocation0 [shape = 'u32[]', space=smem, size = 0x4, offset = 0x4, fixed_abs, tag = 'smem constant byte address 0x4 - core index']
  #allocation1 [shape = 'u32[72,128]{1,0:T(1,128)}', space=vmem, size = 0x9000, scoped, tag = 'internal scratch']
  %s0 = inlined_call_operand.hbm [shape: f32[8,256], index: 0, kind: input, shape index: {}]
  %s1 = inlined_call_operand.hbm [shape: f32[8,288], index: 1, kind: output, shape index: {}]
  %s2 = sld [smem:[#allocation0]]
  $region18: #{tpu_custom_call.1} parent=0
    _
  %s4 = ssub.s32 1, %s2
  %s5 = scalar_select 0, %s4, %s2
  $region1: #{tpu_custom_call.1} parent=0
    #allocation2 [shape = 'u8[8192]{0}', space=vmem, size = 0x2000, scoped, tag = 'input window, operand 0, single buffered']
    #allocation3 [shape = 's32[1]{0}', space=sflag, size = 0x4, scoped, tag = 'scoped memory for tpu_custom_call.1']
    #allocation4 [shape = 's32[1]{0}', space=sflag, size = 0x4, scoped, tag = 'scoped memory for tpu_custom_call.1']
    #allocation5 [shape = 'u8[12288]{0}', space=vmem, size = 0x3000, scoped, tag = 'output window, operand 0, single buffered']
    %6 = vsyncpa [#allocation3], 0
    %7 = vsyncpa [#allocation4], 0
    // Predicated region
    $region2: #{tpu_custom_call.1} parent=1 // pred_check
      _
    $region3: #{tpu_custom_call.1} parent=1 // pred_check_branch
      %9 = sbr.rel (0) target = $region5
    $region4: #{tpu_custom_call.1} parent=1 // pred_region
      %11 = vsyncadd [#allocation3], 0
      %s13 = sshll.u32 %s0, 4
      %s14 = int_to_ptr.hbm [resolvable:$true] %s13
      %s15 = sshll.u32 [#allocation2], 4
      %s16 = int_to_ptr.vmem [resolvable:$true] %s15
      %18 = dma.hbm_to_vmem [thread:$0]  %s14, 256, %s16, [#allocation3]
    $region5: #{tpu_custom_call.1} parent=1 // pred_fallthru
      _
    // Predicated region
    $region6: #{tpu_custom_call.1} parent=1 // pred_check
      _
    $region7: #{tpu_custom_call.1} parent=1 // pred_check_branch
      %20 = sbr.rel (0) target = $region9
    $region8: #{tpu_custom_call.1} parent=1 // pred_region
      %22 = dma.done [#allocation3], 256
    $region9: #{tpu_custom_call.1} parent=1 // pred_fallthru
      _
    %vm23 = vcmask 130048
    %24 = vst.msk [vmem:[#allocation5] sm:$0xff] %vm23, 0.0
    %v25 = vld [vmem:[#allocation2] sm:$0xff]
    %v26 = vld [vmem:[#allocation2 + $0x8] sm:$0xff]
    %29 = vrot.lane.b32.xlu0 %v25, 16
    %v30 = vpop.permute.xlu0 %29
    %31 = vrot.lane.b32.xlu0 %v26, 16
    %v32 = vpop.permute.xlu0 %31
    %v33 = vsel %vm23, %v30, %v32
    %vm37 = vcmask 1047680
    %38 = vst.msk [vmem:[#allocation5] sm:$0xff] %vm37, %v30
    %39 = vst [vmem:[#allocation5 + $0x8] sm:$0xff] %v33
    %40 = vst.msk [vmem:[#allocation5 + $0x10] sm:$0xff] %vm23, %v32
    %vm41 = vcmask 261248
    %42 = vst.msk [vmem:[#allocation5 + $0x10] sm:$0xff] %vm41, 0.0
    // Predicated region
    $region10: #{tpu_custom_call.1} parent=1 // pred_check
      _
    $region11: #{tpu_custom_call.1} parent=1 // pred_check_branch
      %44 = sbr.rel (0) target = $region13
    $region12: #{tpu_custom_call.1} parent=1 // pred_region
      %46 = vsyncadd [#allocation4], 0
      %s48 = sshll.u32 [#allocation5], 4
      %s49 = int_to_ptr.vmem [resolvable:$true] %s48
      %s50 = sshll.u32 %s1, 4
      %s51 = int_to_ptr.hbm [resolvable:$true] %s50
      %53 = dma.vmem_to_hbm [thread:$0]  %s49, 384, %s51, [#allocation4]
    $region13: #{tpu_custom_call.1} parent=1 // pred_fallthru
      _
    // Predicated region
    $region14: #{tpu_custom_call.1} parent=1 // pred_check
      _
    $region15: #{tpu_custom_call.1} parent=1 // pred_check_branch
      %55 = sbr.rel (0) target = $region17
    $region16: #{tpu_custom_call.1} parent=1 // pred_region
      %57 = dma.done [#allocation4], 384
    $region17: #{tpu_custom_call.1} parent=1 // pred_fallthru
      _
    %58 = vsyncpa [#allocation3], 1
    %59 = vsyncpa [#allocation4], 1

</llo_original>
